<compile_context>
chip_gen: v6e
topology: v6e:2x2x1
jax: 0.10.0
libtpu: 0.0.40
codegen_flags: <defaults>
</compile_context>

<pallas_src>
import functools
import math

import jax
import jax.numpy as jnp
from jax import lax
from jax.experimental import pallas as pl
from jax.experimental.pallas import tpu as pltpu

EPS = 1e-12
_TARGET_BLOCK_BYTES = 4 * 1024 * 1024     # streaming-block target (f32-equivalent)
_FUSED_HEADROOM_BYTES = 8 * 1024 * 1024   # slack kept when choosing the fused path


def _round_up(v, m):
    return (v + m - 1) // m * m


def _cdiv(a, b):
    return (a + b - 1) // b


def _vmem_limit_bytes():
    # Generation-aware scoped-VMEM limit; falls back to a v7x-safe value.
    try:
        cap = int(pltpu.get_tpu_info().vmem_capacity_bytes)
    except Exception:
        cap = 64 * 1024 * 1024
    return min(cap * 3 // 4, 96 * 1024 * 1024)


# ------------------------------ fused single pass ------------------------------

def _fused_kernel(x_ref, w_ref, b_ref, o_ref, *, inv_n, eps):
    # One batch element fully resident: centered statistics (no cancellation),
    # then one FMA per element for the normalization + affine.
    x = x_ref[...].astype(jnp.float32)                          # (1, C, T)
    mean = jnp.sum(x, axis=(0, 1, 2), keepdims=True) * inv_n     # (1, 1, 1)
    c = x - mean
    var = jnp.sum(c * c, axis=(0, 1, 2), keepdims=True) * inv_n  # (1, 1, 1)
    scale = w_ref[...] * lax.rsqrt(var + eps)                    # (1, C, 1)
    o_ref[...] = (c * scale + b_ref[...]).astype(o_ref.dtype)


def _fused_vmem_estimate(C, T, itemsize):
    # in + out (double-buffered) + ~3 f32-sized temps, with sublane/lane padding.
    sub = 8 * max(1, 4 // itemsize)
    io = 4 * _round_up(C, sub) * _round_up(T, 128) * itemsize
    tmp = 3 * _round_up(C, 8) * _round_up(T, 128) * 4
    return io + tmp


def _fused_path(x, w3, b3, eps, vmem_limit):
    B, C, T = x.shape
    kernel = functools.partial(_fused_kernel, inv_n=1.0 / (C * T), eps=eps)
    return pl.pallas_call(
        kernel,
        out_shape=jax.ShapeDtypeStruct((B, C, T), x.dtype),
        grid_spec=pltpu.PrefetchScalarGridSpec(
            num_scalar_prefetch=0,
            grid=(B,),
            in_specs=[
                pl.BlockSpec((1, C, T), lambda b: (b, 0, 0)),
                pl.BlockSpec((1, C, 1), lambda b: (0, 0, 0)),
                pl.BlockSpec((1, C, 1), lambda b: (0, 0, 0)),
            ],
            out_specs=pl.BlockSpec((1, C, T), lambda b: (b, 0, 0)),
        ),
        compiler_params=pltpu.CompilerParams(
            dimension_semantics=("parallel",),
            vmem_limit_bytes=vmem_limit,
        ),
    )(x, w3, b3)


# ---------------------------- two-pass streaming path ---------------------------

def _stats_kernel(x_ref, pilot_ref, s_ref, q_ref, s_acc, q_acc, *,
                  tile, n_per, true_t):
    t = pl.program_id(2)

    @pl.when(t == 0)
    def _():
        s_acc[...] = jnp.zeros_like(s_acc)
        q_acc[...] = jnp.zeros_like(q_acc)

    # Mask the ragged tail / any out-of-range balancing block (no jnp.pad needed).
    start = (pl.program_id(1) * n_per + t) * tile
    lane = lax.broadcasted_iota(jnp.int32, x_ref.shape, dimension=2)
    valid = (start + lane) < true_t

    x = x_ref[...].astype(jnp.float32) - pilot_ref[...]          # pilot-shifted
    x = jnp.where(valid, x, 0.0)
    # Pure vector adds into per-lane partials; the full reduce happens once below.
    s_acc[...] += jnp.sum(x, axis=1, keepdims=True)              # (1, 1, tile)
    q_acc[...] += jnp.sum(x * x, axis=1, keepdims=True)

    @pl.when(t == n_per - 1)
    def _():
        s_ref[...] = jnp.sum(s_acc[...], axis=(0, 1, 2),
                             keepdims=True).reshape(s_ref.shape)
        q_ref[...] = jnp.sum(q_acc[...], axis=(0, 1, 2),
                             keepdims=True).reshape(q_ref.shape)


def _norm_kernel(x_ref, scale_ref, shift_ref, o_ref):
    # Single fused multiply-add per element; scale/shift fold mean, rsqrt, affine.
    x = x_ref[...].astype(jnp.float32)
    o_ref[...] = (x * scale_ref[...] + shift_ref[...]).astype(o_ref.dtype)


def _two_pass_path(x, w, b, eps, vmem_limit, tile_hint):
    B, C, T = x.shape

    # Lane-dense streaming tile: ~_TARGET_BLOCK_BYTES per block, balanced over T.
    c_pad = _round_up(C, 8)
    if tile_hint is None:
        t_hint = max(128, (_TARGET_BLOCK_BYTES // (c_pad * 4 * 128)) * 128)
    else:
        t_hint = max(128, (tile_hint // 128) * 128)

    n_split = 2 if T > t_hint else 1          # extra parallel axis (v7x, small B)
    n_blocks = _round_up(_cdiv(T, t_hint), n_split)
    tile = T if n_blocks == 1 else _round_up(_cdiv(T, n_blocks), 128)
    n_cover = _cdiv(T, tile)                  # blocks that actually touch data
    n_per = n_blocks // n_split

    pilot = x[:, :1, :1].astype(jnp.float32)  # cheap per-batch shift vs cancellation

    # ---- pass 1: per-batch sums of (x - pilot) and (x - pilot)^2 ----------------
    part_shape = jax.ShapeDtypeStruct((B, n_split, 1, 1), jnp.float32)
    x_map = lambda bb, p, t: (bb, 0, jnp.minimum(p * n_per + t, n_cover - 1))
    s_part, q_part = pl.pallas_call(
        functools.partial(_stats_kernel, tile=tile, n_per=n_per, true_t=T),
        out_shape=(part_shape, part_shape),
        grid_spec=pltpu.PrefetchScalarGridSpec(
            num_scalar_prefetch=0,
            grid=(B, n_split, n_per),
            in_specs=[
                pl.BlockSpec((1, C, tile), x_map),
                pl.BlockSpec((1, 1, 1), lambda bb, p, t: (bb, 0, 0)),
            ],
            out_specs=(
                pl.BlockSpec((1, 1, 1, 1), lambda bb, p, t: (bb, p, 0, 0)),
                pl.BlockSpec((1, 1, 1, 1), lambda bb, p, t: (bb, p, 0, 0)),
            ),
            scratch_shapes=[pltpu.VMEM((1, 1, tile), jnp.float32),
                            pltpu.VMEM((1, 1, tile), jnp.float32)],
        ),
        compiler_params=pltpu.CompilerParams(
            dimension_semantics=("parallel", "parallel", "arbitrary"),
            vmem_limit_bytes=vmem_limit,
        ),
    )(x, pilot)

    # ---- tiny glue: fold mean / rsqrt / affine into per-channel scale & shift ---
    inv_n = 1.0 / (C * T)
    s = jnp.sum(s_part, axis=(1, 2, 3)) * inv_n                  # E[x - pilot]
    q = jnp.sum(q_part, axis=(1, 2, 3)) * inv_n                  # E[(x - pilot)^2]
    mean = pilot.reshape(B) + s
    var = jnp.maximum(q - s * s, 0.0)                            # clamp vs. rounding
    inv_std = lax.rsqrt(var + jnp.float32(eps))
    scale2 = w[None, :] * inv_std[:, None]                       # (B, C)
    shift2 = b[None, :] - mean[:, None] * scale2                 # (B, C)
    scale = scale2.reshape(B, C, 1)
    shift = shift2.reshape(B, C, 1)

    # ---- pass 2: o = x * scale + shift (ragged tail via partial-block stores) ---
    return pl.pallas_call(
        _norm_kernel,
        out_shape=jax.ShapeDtypeStruct((B, C, T), x.dtype),
        grid_spec=pltpu.PrefetchScalarGridSpec(
            num_scalar_prefetch=0,
            grid=(B, n_cover),
            in_specs=[
                pl.BlockSpec((1, C, tile), lambda bb, t: (bb, 0, t)),
                pl.BlockSpec((1, C, 1), lambda bb, t: (bb, 0, 0)),
                pl.BlockSpec((1, C, 1), lambda bb, t: (bb, 0, 0)),
            ],
            out_specs=pl.BlockSpec((1, C, tile), lambda bb, t: (bb, 0, t)),
        ),
        compiler_params=pltpu.CompilerParams(
            dimension_semantics=("parallel", "parallel"),
            vmem_limit_bytes=vmem_limit,
        ),
    )(x, scale, shift)


# ------------------------------------ wrapper -----------------------------------

@functools.partial(jax.jit, static_argnames=("eps", "tile_t", "force_two_pass"))
def global_layer_norm(x, weight, bias, *, eps=EPS, tile_t=None, force_two_pass=False):
    """GroupNorm(1, C) over input (B, C, *). Returns the same shape/dtype as x."""
    orig_shape = x.shape
    B, C = orig_shape[0], orig_shape[1]
    T = int(math.prod(orig_shape[2:]))
    x3 = x.reshape(B, C, T)

    w = weight.astype(jnp.float32)
    b = bias.astype(jnp.float32)

    vmem_limit = _vmem_limit_bytes()
    itemsize = jnp.dtype(x.dtype).itemsize
    use_fused = (not force_two_pass) and (
        _fused_vmem_estimate(C, T, itemsize) + _FUSED_HEADROOM_BYTES <= vmem_limit)

    if use_fused:
        out = _fused_path(x3, w.reshape(1, C, 1), b.reshape(1, C, 1), eps, vmem_limit)
    else:
        out = _two_pass_path(x3, w, b, eps, vmem_limit, tile_t)

    return out.reshape(orig_shape)


def _reference(x, weight, bias, eps=EPS):
    # Pure-JAX reference matching torch.nn.GroupNorm(1, C, eps=eps).
    B, C = x.shape[0], x.shape[1]
    xr = x.reshape(B, C, -1)
    mean = jnp.mean(xr, axis=(1, 2), keepdims=True)
    var = jnp.mean((xr - mean) ** 2, axis=(1, 2), keepdims=True)
    xn = (xr - mean) / jnp.sqrt(var + eps)
    out = xn * weight[None, :, None] + bias[None, :, None]
    return out.reshape(x.shape)


if __name__ == "__main__":
    key = jax.random.PRNGKey(0)
    kx, kw, kb, kx2 = jax.random.split(key, 4)

    # Small shape consistent with (batch, num_features, time) -> fused path.
    B, C, T = 2, 4, 16
    x = jax.random.normal(kx, (B, C, T), dtype=jnp.float32)
    weight = 1.0 + 0.1 * jax.random.normal(kw, (C,), dtype=jnp.float32)
    bias = 0.1 * jax.random.normal(kb, (C,), dtype=jnp.float32)

    out = jax.block_until_ready(global_layer_norm(x, weight, bias))
    ref = _reference(x, weight, bias)
    assert out.shape == (B, C, T)
    assert jnp.max(jnp.abs(out - ref)) < 1e-4, "fused path mismatch vs reference"

    # Also exercise the streaming two-pass path (time split + ragged tail) small.
    T2 = 300  # deliberately not a multiple of 128
    x2 = jax.random.normal(kx2, (B, C, T2), dtype=jnp.float32)
    out2 = jax.block_until_ready(
        global_layer_norm(x2, weight, bias, tile_t=128, force_two_pass=True))
    ref2 = _reference(x2, weight, bias)
    assert out2.shape == (B, C, T2)
    assert jnp.max(jnp.abs(out2 - ref2)) < 1e-4, "two-pass path mismatch vs reference"

    print("KERNEL_OK")
</pallas_src>

<mosaic_0001>
module attributes {stable_mosaic.version = 11 : i64} {
  func.func @_fused_kernel(%arg0: i32, %arg1: memref<1x4x16xf32, #tpu.memory_space<vmem>>, %arg2: memref<1x4x1xf32, #tpu.memory_space<vmem>>, %arg3: memref<1x4x1xf32, #tpu.memory_space<vmem>>, %arg4: memref<1x4x16xf32, #tpu.memory_space<vmem>>) attributes {dimension_semantics = [#tpu.dimension_semantics<parallel>], iteration_bounds = array<i64: 2>, scalar_prefetch = 0 : i64, scratch_operands = 0 : i64, tpu.core_type = #tpu.core_type<tc>, window_params = [{transform_indices = @transform_0, window_bounds = array<i64: 1, 4, 16>}, {pipeline_mode = #tpu.pipeline_mode<synchronous>, transform_indices = @transform_1, window_bounds = array<i64: 1, 4, 1>}, {pipeline_mode = #tpu.pipeline_mode<synchronous>, transform_indices = @transform_2, window_bounds = array<i64: 1, 4, 1>}, {transform_indices = @transform_3, window_bounds = array<i64: 1, 4, 16>}]} {
    %c0 = arith.constant 0 : index
    %c0_0 = arith.constant 0 : index
    %c0_1 = arith.constant 0 : index
    %0 = vector.load %arg1[%c0, %c0_0, %c0_1] : memref<1x4x16xf32, #tpu.memory_space<vmem>>, vector<1x4x16xf32>
    %1 = vector.shape_cast %0 : vector<1x4x16xf32> to vector<1x1x4x16xf32>
    %cst = arith.constant dense<0.000000e+00> : vector<1xf32>
    %2 = vector.multi_reduction <add>, %1, %cst [1, 2, 3] : vector<1x1x4x16xf32> to vector<1xf32>
    %3 = vector.shape_cast %2 : vector<1xf32> to vector<1x1x1x1xf32>
    %4 = vector.extract %3[0, 0, 0, 0] : f32 from vector<1x1x1x1xf32>
    %5 = vector.broadcast %4 : f32 to vector<1x1x1xf32>
    %cst_2 = arith.constant 1.562500e-02 : f32
    %6 = vector.broadcast %cst_2 : f32 to vector<1x1x1xf32>
    %7 = arith.mulf %5, %6 : vector<1x1x1xf32>
    %8 = vector.broadcast %7 : vector<1x1x1xf32> to vector<1x4x16xf32>
    %9 = arith.subf %0, %8 : vector<1x4x16xf32>
    %10 = arith.mulf %9, %9 : vector<1x4x16xf32>
    %11 = vector.shape_cast %10 : vector<1x4x16xf32> to vector<1x1x4x16xf32>
    %cst_3 = arith.constant dense<0.000000e+00> : vector<1xf32>
    %12 = vector.multi_reduction <add>, %11, %cst_3 [1, 2, 3] : vector<1x1x4x16xf32> to vector<1xf32>
    %13 = vector.shape_cast %12 : vector<1xf32> to vector<1x1x1x1xf32>
    %14 = vector.extract %13[0, 0, 0, 0] : f32 from vector<1x1x1x1xf32>
    %15 = vector.broadcast %14 : f32 to vector<1x1x1xf32>
    %cst_4 = arith.constant 1.562500e-02 : f32
    %16 = vector.broadcast %cst_4 : f32 to vector<1x1x1xf32>
    %17 = arith.mulf %15, %16 : vector<1x1x1xf32>
    %c0_5 = arith.constant 0 : index
    %c0_6 = arith.constant 0 : index
    %c0_7 = arith.constant 0 : index
    %18 = vector.load %arg2[%c0_5, %c0_6, %c0_7] : memref<1x4x1xf32, #tpu.memory_space<vmem>>, vector<1x4x1xf32>
    %cst_8 = arith.constant 9.99999996E-13 : f32
    %19 = vector.broadcast %cst_8 : f32 to vector<1x1x1xf32>
    %20 = arith.addf %17, %19 : vector<1x1x1xf32>
    %21 = math.rsqrt %20 : vector<1x1x1xf32>
    %22 = vector.broadcast %21 : vector<1x1x1xf32> to vector<1x4x1xf32>
    %23 = arith.mulf %18, %22 : vector<1x4x1xf32>
    %24 = vector.broadcast %23 : vector<1x4x1xf32> to vector<1x4x16xf32>
    %25 = arith.mulf %9, %24 : vector<1x4x16xf32>
    %c0_9 = arith.constant 0 : index
    %c0_10 = arith.constant 0 : index
    %c0_11 = arith.constant 0 : index
    %26 = vector.load %arg3[%c0_9, %c0_10, %c0_11] : memref<1x4x1xf32, #tpu.memory_space<vmem>>, vector<1x4x1xf32>
    %27 = vector.broadcast %26 : vector<1x4x1xf32> to vector<1x4x16xf32>
    %28 = arith.addf %25, %27 : vector<1x4x16xf32>
    %c0_12 = arith.constant 0 : index
    %c0_13 = arith.constant 0 : index
    %c0_14 = arith.constant 0 : index
    %29 = vector.load %arg4[%c0_12, %c0_13, %c0_14] : memref<1x4x16xf32, #tpu.memory_space<vmem>>, vector<1x4x16xf32>
    tpu.vector_store %arg4[%c0_12, %c0_13, %c0_14], %28 {strides = array<i32>} : memref<1x4x16xf32, #tpu.memory_space<vmem>>, vector<1x4x16xf32>,
    return
  }
  func.func @transform_0(%arg0: i32) -> (i32, i32, i32) {
    %c0_i32 = arith.constant 0 : i32
    %c0_i32_0 = arith.constant 0 : i32
    %c0_i32_1 = arith.constant 0 : i32
    return %arg0, %c0_i32, %c0_i32_0 : i32, i32, i32
  }
  func.func @transform_1(%arg0: i32) -> (i32, i32, i32) {
    %c0_i32 = arith.constant 0 : i32
    %c0_i32_0 = arith.constant 0 : i32
    %c0_i32_1 = arith.constant 0 : i32
    %c0_i32_2 = arith.constant 0 : i32
    return %c0_i32, %c0_i32_0, %c0_i32_1 : i32, i32, i32
  }
  func.func @transform_2(%arg0: i32) -> (i32, i32, i32) {
    %c0_i32 = arith.constant 0 : i32
    %c0_i32_0 = arith.constant 0 : i32
    %c0_i32_1 = arith.constant 0 : i32
    %c0_i32_2 = arith.constant 0 : i32
    return %c0_i32, %c0_i32_0, %c0_i32_1 : i32, i32, i32
  }
  func.func @transform_3(%arg0: i32) -> (i32, i32, i32) {
    %c0_i32 = arith.constant 0 : i32
    %c0_i32_0 = arith.constant 0 : i32
    %c0_i32_1 = arith.constant 0 : i32
    return %arg0, %c0_i32, %c0_i32_0 : i32, i32, i32
  }
}

</mosaic_0001>

<llo_original>
// kernel: global_layer_norm.1
$region0: #{global_layer_norm.1}
  #allocation0 [shape = 'u32[]', space=smem, size = 0x4, offset = 0x4, fixed_abs, tag = 'smem constant byte address 0x4 - core index']
  #allocation1 [shape = 'u32[144,128]{1,0:T(1,128)}', space=vmem, size = 0x12000, scoped, tag = 'internal scratch']
  %s0 = inlined_call_operand.vmem [shape: f32[2,4,16], index: 0, kind: input, shape index: {}]
  %s1 = inlined_call_operand.vmem [shape: f32[1,4,1], index: 1, kind: input, shape index: {}]
  %s2 = inlined_call_operand.vmem [shape: f32[1,4,1], index: 2, kind: input, shape index: {}]
  %s3 = inlined_call_operand.hbm [shape: f32[2,4,16], index: 3, kind: output, shape index: {}]
  %s4 = sld [smem:[#allocation0]]
  $region45: #{global_layer_norm.1} parent=0
    _
  %s6 = ssub.s32 1, %s4
  %s7 = scalar_select 0, %s6, %s4
  $region1: #{global_layer_norm.1} parent=0
    #allocation2 [shape = 'u8[4096]{0}', space=vmem, size = 0x1000, scoped, tag = 'output window, operand 0']
    #allocation3 [shape = 's32[2]{0}', space=sflag, size = 0x8, scoped, tag = 'scoped memory for global_layer_norm.1']
    %8 = vsyncpa [#allocation3], 0
    %s9 = scalar_lea.sflag [#allocation3], 1
    %10 = vsyncpa %s9, 0
    loop: start=0, step=1, limit=4
    $region2: #{global_layer_norm.1} parent=1 // loop_pre_header
      _
    $region3: #{global_layer_norm.1} parent=1 // loop_header
      %s12 = sphi 0, %s16
      %p13 = scmp.ge.s32.totalorder %s12, 4
      %s22 = sphi 0, %s24
      %s25 = sphi 0, %s22
      %s26 = sphi 0, %s25
      %s42 = sphi 0, %s26
      %s46 = sphi 0, %s46
      %s48 = sphi 0, %s46
      %s49 = sphi 0, %s48
      %s63 = sphi 0, %s49
      %s67 = sphi 0, %s67
      %s69 = sphi 0, %s67
      %s70 = sphi 0, %s69
      %s84 = sphi 0, %s70
      %s90 = sphi 0, %s92
      %s93 = sphi 0, %s90
      %s94 = sphi 0, %s93
      %s110 = sphi 0, %s94
    $region4: #{global_layer_norm.1} parent=1 // loop_header_branch
      %15 = sbr.rel (%p13) target = $region8
    $region5: #{global_layer_norm.1} parent=1 // loop_body
      %s17 = ssub.s32 %s12, 1
      %s18 = ssub.s32 %s12, 2
      %s19 = sadd.s32 %s12, 1
      %s20 = ssub.s32 %s12, %s19
      %p21 = scmp.eq.s32.totalorder %s20, 0
      %s23 = sadd.s32 %s22, 1
      %s24 = scalar_select %p21, %s22, %s23
      %p27 = pneg %p21
      %p28 = scmp.eq.s32.totalorder %s12, 1
      %p29 = por %p27, %p28
      %p30 = scmp.ne.s32.totalorder %s22, %s25
      %p31 = scmp.eq.s32.totalorder %s12, 0
      %p32 = por %p30, %p31
      %p33 = scmp.ne.s32.totalorder %s22, %s25
      %p34 = scmp.eq.s32.totalorder %s17, 1
      %p35 = por %p33, %p34
      %p36 = scmp.ne.s32.totalorder %s25, %s26
      %p37 = scmp.eq.s32.totalorder %s17, 0
      %p38 = por %p36, %p37
      %p39 = scmp.ne.s32.totalorder %s25, %s26
      %p40 = scmp.eq.s32.totalorder %s18, 1
      %p41 = por %p39, %p40
      %p43 = scmp.ne.s32.totalorder %s26, %s42
      %p44 = scmp.eq.s32.totalorder %s18, 0
      %p45 = por %p43, %p44
      %s47 = sadd.s32 %s46, 1
      %p50 = scmp.eq.s32.totalorder %s12, 1
      %p51 = scmp.ne.s32.totalorder %s46, %s48
      %p52 = scmp.eq.s32.totalorder %s12, 0
      %p53 = por %p51, %p52
      %p54 = scmp.ne.s32.totalorder %s46, %s48
      %p55 = scmp.eq.s32.totalorder %s17, 1
      %p56 = por %p54, %p55
      %p57 = scmp.ne.s32.totalorder %s48, %s49
      %p58 = scmp.eq.s32.totalorder %s17, 0
      %p59 = por %p57, %p58
      %p60 = scmp.ne.s32.totalorder %s48, %s49
      %p61 = scmp.eq.s32.totalorder %s18, 1
      %p62 = por %p60, %p61
      %p64 = scmp.ne.s32.totalorder %s49, %s63
      %p65 = scmp.eq.s32.totalorder %s18, 0
      %p66 = por %p64, %p65
      %s68 = sadd.s32 %s67, 1
      %p71 = scmp.eq.s32.totalorder %s12, 1
      %p72 = scmp.ne.s32.totalorder %s67, %s69
      %p73 = scmp.eq.s32.totalorder %s12, 0
      %p74 = por %p72, %p73
      %p75 = scmp.ne.s32.totalorder %s67, %s69
      %p76 = scmp.eq.s32.totalorder %s17, 1
      %p77 = por %p75, %p76
      %p78 = scmp.ne.s32.totalorder %s69, %s70
      %p79 = scmp.eq.s32.totalorder %s17, 0
      %p80 = por %p78, %p79
      %p81 = scmp.ne.s32.totalorder %s69, %s70
      %p82 = scmp.eq.s32.totalorder %s18, 1
      %p83 = por %p81, %p82
      %p85 = scmp.ne.s32.totalorder %s70, %s84
      %p86 = scmp.eq.s32.totalorder %s18, 0
      %p87 = por %p85, %p86
      %s88 = ssub.s32 %s12, %s19
      %p89 = scmp.eq.s32.totalorder %s88, 0
      %s91 = sadd.s32 %s90, 1
      %s92 = scalar_select %p89, %s90, %s91
      %p95 = pneg %p89
      %p96 = scmp.eq.s32.totalorder %s12, 1
      %p97 = por %p95, %p96
      %p98 = scmp.ne.s32.totalorder %s90, %s93
      %p99 = scmp.eq.s32.totalorder %s12, 0
      %p100 = por %p98, %p99
      %p101 = scmp.ne.s32.totalorder %s90, %s93
      %p102 = scmp.eq.s32.totalorder %s17, 1
      %p103 = por %p101, %p102
      %p104 = scmp.ne.s32.totalorder %s93, %s94
      %p105 = scmp.eq.s32.totalorder %s17, 0
      %p106 = por %p104, %p105
      %p107 = scmp.ne.s32.totalorder %s93, %s94
      %p108 = scmp.eq.s32.totalorder %s18, 1
      %p109 = por %p107, %p108
      %p111 = scmp.ne.s32.totalorder %s94, %s110
      %p112 = scmp.eq.s32.totalorder %s18, 0
      %p113 = por %p111, %p112
      %p114 = scmp.le.s32.totalorder 1, %s12
      %p115 = scmp.lt.s32.totalorder %s12, 3
      %p116 = pnand %p114, %p115
      %p117 = pneg %p116
      // Predicated region
      $region9: #{global_layer_norm.1} parent=5 // pred_check
        _
      $region10: #{global_layer_norm.1} parent=5 // pred_check_branch
        %119 = sbr.rel (%p116) target = $region12
      $region11: #{global_layer_norm.1} parent=5 // pred_region
        %s120 = ssub.s32 %s12, 1
        // Predicated region
        $region13: #{global_layer_norm.1} parent=11 // pred_check
          %p121 = pneg %p59
        $region14: #{global_layer_norm.1} parent=11 // pred_check_branch
          %123 = sbr.rel (%p121) target = $region16
        $region15: #{global_layer_norm.1} parent=11 // pred_region
          _
        $region16: #{global_layer_norm.1} parent=11 // pred_fallthru
          _
        // Predicated region
        $region17: #{global_layer_norm.1} parent=11 // pred_check
          %p124 = pneg %p80
        $region18: #{global_layer_norm.1} parent=11 // pred_check_branch
          %126 = sbr.rel (%p124) target = $region20
        $region19: #{global_layer_norm.1} parent=11 // pred_region
          _
        $region20: #{global_layer_norm.1} parent=11 // pred_fallthru
          _
      $region12: #{global_layer_norm.1} parent=5 // pred_fallthru
        _
      %p127 = scmp.lt.s32.totalorder %s12, 2
      // Predicated region
      $region21: #{global_layer_norm.1} parent=5 // pred_check
        %p128 = pneg %p127
      $region22: #{global_layer_norm.1} parent=5 // pred_check_branch
        %130 = sbr.rel (%p128) target = $region24
      $region23: #{global_layer_norm.1} parent=5 // pred_region
        // Predicated region
        $region25: #{global_layer_norm.1} parent=23 // pred_check
          %p131 = pneg %p32
        $region26: #{global_layer_norm.1} parent=23 // pred_check_branch
          %133 = sbr.rel (%p131) target = $region28
        $region27: #{global_layer_norm.1} parent=23 // pred_region
          %p134 = scmp.lt.s32.totalorder %s12, 1
          %s135 = scalar_select %p134, %s12, 1
          %s136 = smul.addr %s135, 4
          %s137 = scalar_lea.vmem %s0, %s136
        $region28: #{global_layer_norm.1} parent=23 // pred_fallthru
          _
      $region24: #{global_layer_norm.1} parent=5 // pred_fallthru
        _
      %p138 = scmp.le.s32.totalorder 1, %s12
      %p139 = scmp.lt.s32.totalorder %s12, 3
      %p140 = pnand %p138, %p139
      %p141 = pneg %p140
      // Predicated region
      $region29: #{global_layer_norm.1} parent=5 // pred_check
        _
      $region30: #{global_layer_norm.1} parent=5 // pred_check_branch
        %143 = sbr.rel (%p140) target = $region32
      $region31: #{global_layer_norm.1} parent=5 // pred_region
        %s144 = ssub.s32 %s12, 1
        %p145 = scmp.lt.s32.totalorder %s17, 1
        %s146 = scalar_select %p145, %s17, 1
        %s147 = smul.addr %s146, 4
        %s148 = scalar_lea.vmem %s0, %s147
        %p149 = pneg %p38
        %p150 = pneg %p35
        %p151 = pneg %p59
        %p152 = pneg %p56
        %p153 = pneg %p80
        %p154 = pneg %p77
        %p155 = pneg %p106
        %p156 = pneg %p103
        %s157 = sand.u32 %s93, 1
        %s158 = scalar_lea.sflag [#allocation3], %s157
        %s159 = sand.u32 %s93, 1
        %s160 = smul.addr %s159, 4
        %s161 = scalar_lea.vmem [#allocation2], %s160
        %p162 = scmp.lt.s32.totalorder %s17, 1
        %s163 = scalar_select %p162, %s17, 1
        %s164 = smul.addr %s163, 4
        %s165 = scalar_lea.vmem %s0, %s164
        %v166 = vld [vmem:[%s165] sm:$0xf]
        %vm167 = vcmask 125952
        %v168 = vsel %vm167, %v166, 0.0
        %169 = vadd.xlane.f32.xlu0 %v168
        %v170 = vpop.xlane.xlu0 %169
        %v171 = vrot.slane %v170, 4
        %v172 = vadd.f32 %v170, %v171
        %v173 = vrot.slane %v172, 2
        %v174 = vadd.f32 %v172, %v173
        %v175 = vrot.slane %v174, 1
        %v176 = vadd.f32 %v174, %v175
        %s177 = vtos %v176
        %v178 = vstv %s177
        %v179 = vmul.f32 %v178, 0.015625
        %v180 = vsub.f32 %v166, %v179
        %v181 = vmul.f32 %v180, %v180
        %v182 = vsel %vm167, %v181, 0.0
        %183 = vadd.xlane.f32.xlu0 %v182
        %v184 = vpop.xlane.xlu0 %183
        %v185 = vrot.slane %v184, 4
        %v186 = vadd.f32 %v184, %v185
        %v187 = vrot.slane %v186, 2
        %v188 = vadd.f32 %v186, %v187
        %v189 = vrot.slane %v188, 1
        %v190 = vadd.f32 %v188, %v189
        %s191 = vtos %v190
        %v192 = vstv %s191
        %v193 = vmul.f32 %v192, 0.015625
        %v194 = vld [vmem:[%s1] sm:$0xf]
        %v195 = vadd.f32 %v193, 1e-12
        %v196 = vrsqrt.pop %v195
        %v197 = vmul.f32 %v194, %v196
        %199 = vset.pattern.permute.xlu0 0
        %200 = vperm.xlu0 %199, %v197
        %v201 = vpop.permute.xlu0 %200
        %v203 = vmul.f32 %v180, %v201
        %v204 = vld [vmem:[%s2] sm:$0xf]
        %206 = vset.pattern.permute.xlu0 0
        %207 = vperm.xlu0 %206, %v204
        %v208 = vpop.permute.xlu0 %207
        %v210 = vadd.f32 %v203, %v208
        %211 = vst.msk [vmem:[%s161] sm:$0xf] %vm167, %v210
        %s212 = sand.u32 %s93, 1
        %s213 = scalar_lea.sflag [#allocation3], %s212
        %s214 = sand.u32 %s93, 1
        %s215 = smul.addr %s214, 4
        %s216 = scalar_lea.vmem [#allocation2], %s215
        // Predicated region
        $region33: #{global_layer_norm.1} parent=31 // pred_check
          %p217 = pneg %p103
        $region34: #{global_layer_norm.1} parent=31 // pred_check_branch
          %219 = sbr.rel (%p217) target = $region36
        $region35: #{global_layer_norm.1} parent=31 // pred_region
          %s221 = ssub.s32 64, 64
          %222 = vsyncadd %s213, %s221
          %s223 = smul.addr %s17, 64
          %s224 = scalar_lea.hbm %s3, %s223
          %s226 = sshll.u32 %s216, 4
          %s227 = int_to_ptr.vmem [resolvable:$true] %s226
          %229 = dma.vmem_to_hbm [thread:$0]  %s227, 64, %s224, %s213
        $region36: #{global_layer_norm.1} parent=31 // pred_fallthru
          _
      $region32: #{global_layer_norm.1} parent=5 // pred_fallthru
        _
      %p230 = scmp.le.s32.totalorder 2, %s12
      // Predicated region
      $region37: #{global_layer_norm.1} parent=5 // pred_check
        %p231 = pneg %p230
      $region38: #{global_layer_norm.1} parent=5 // pred_check_branch
        %233 = sbr.rel (%p231) target = $region40
      $region39: #{global_layer_norm.1} parent=5 // pred_region
        %s234 = ssub.s32 %s12, 2
        // Predicated region
        $region41: #{global_layer_norm.1} parent=39 // pred_check
          %p235 = pneg %p109
        $region42: #{global_layer_norm.1} parent=39 // pred_check_branch
          %237 = sbr.rel (%p235) target = $region44
        $region43: #{global_layer_norm.1} parent=39 // pred_region
          %s238 = sand.u32 %s94, 1
          %s239 = scalar_lea.sflag [#allocation3], %s238
          %s240 = sand.u32 %s94, 1
          %s241 = smul.addr %s240, 4
          %s242 = scalar_lea.vmem [#allocation2], %s241
          %243 = dma.done %s239, 64
        $region44: #{global_layer_norm.1} parent=39 // pred_fallthru
          _
      $region40: #{global_layer_norm.1} parent=5 // pred_fallthru
        _
    $region6: #{global_layer_norm.1} parent=1 // loop_footer
      %s16 = sadd.s32 1, %s12
    $region7: #{global_layer_norm.1} parent=1 // loop_footer_branch
      %11 = sbr.rel target = $region3
    $region8: #{global_layer_norm.1} parent=1 // loop_exit
      _
    %244 = vsyncpa [#allocation3], 1
    %s245 = scalar_lea.sflag [#allocation3], 1
    %246 = vsyncpa %s245, 1

</llo_original>
